<compile_context>
chip_gen: v6e
topology: v6e:2x2x1
jax: 0.10.0
libtpu: 0.0.40
codegen_flags: <defaults>
</compile_context>

<pallas_src>
import math

import jax
import jax.numpy as jnp
import numpy as np
from jax.experimental import pallas as pl

N = 128          # number of boundary point pairs (left/right); scale up to amortize launch cost
D_B = 1          # non-periodic (e.g. time) dimension  (kernel assumes D_B == 1)
D_IN = 1 + D_B   # periodic coordinate + non-periodic coords
H = 32           # hidden width of the model
D_OUT = 2        # model output dimension (reduced by SquaredError along dim=1)

INTERVAL_A = 0.0            # left boundary of the periodic interval
INTERVAL_B = 2.0 * math.pi  # right boundary of the periodic interval

_HIGHEST = jax.lax.Precision.HIGHEST


def _periodic_condition_kernel(t_ref, w1t_ref, b1_ref, w2t_ref, b2_ref,
                               w3t_ref, unred_ref):
    """Transposed MLP: activations are (features, points), points on lanes.

    t_ref    : (1, N)       non-periodic coordinates (D_B == 1)
    w1t_ref  : (H, D_IN)    W1^T  (col 0 = periodic coord, col 1 = t)
    b1_ref   : (H, 1)       b1^T
    w2t_ref  : (H, H)       W2^T
    b2_ref   : (H, 1)
    w3t_ref  : (D_OUT, H)   W3^T              (b3 cancels in u_left - u_right)
    unred_ref: (1, N)       per-point SquaredError (lane-dense)
    """
    w1_per = w1t_ref[:, 0:1]                    # (H, 1) periodic-coordinate column
    w1_t = w1t_ref[:, 1:2]                      # (H, 1) non-periodic column

    # Layer 1 without the MXU: x @ W1 == x0 * W1[0,:] + t * W1[1,:]
    # (K = 2 contraction replaced by a rank-1 VPU broadcast + constant add).
    shared = w1_t * t_ref[...] + b1_ref[...]    # (H, N)
    if INTERVAL_A == 0.0:                       # trace-time constant fold
        left = shared
    else:
        left = shared + jnp.float32(INTERVAL_A) * w1_per
    right = shared + jnp.float32(INTERVAL_B) * w1_per
    h1 = jnp.tanh(jnp.concatenate([left, right], axis=1))   # (H, 2N) fused batch

    # Layer 2: a single MXU pass over the fused (., 2N) batch (fills the 256-wide
    # MXU on v6e/v7x; two passes either way on v5e's 128x128).
    h2 = jnp.tanh(jnp.dot(w2t_ref[...], h1,
                          precision=_HIGHEST,
                          preferred_element_type=jnp.float32) + b2_ref[...])  # (H, 2N)

    # residual folded through the linear layer 3:
    #   W3^T @ h2_left + b3 - (W3^T @ h2_right + b3) == W3^T @ (h2_left - h2_right)
    dh2 = h2[:, :N] - h2[:, N:]                               # (H, N)
    res = jnp.dot(w3t_ref[...], dh2,
                  precision=_HIGHEST,
                  preferred_element_type=jnp.float32)          # (D_OUT, N)

    # error_fn = SquaredError(): sum of squares over the space axis -> (1, N)
    unred_ref[...] = jnp.sum(res * res, axis=0, keepdims=True)


def make_kernel_params(params):
    """One-time layout plumbing (do this at init, NOT per training step):
    transpose torch-layout weights so the kernel sees (out_features, in_features)
    operands directly.  b3 is dropped: it cancels in the periodicity residual."""
    w1, b1, w2, b2, w3, _b3 = params
    return (jnp.asarray(w1.T), jnp.asarray(b1.T),
            jnp.asarray(w2.T), jnp.asarray(b2.T),
            jnp.asarray(w3.T))


@jax.jit
def periodic_condition_loss(t_row, kernel_params):
    """t_row: (1, N) non-periodic sample points (lane-dense).
    Returns (reduced loss scalar, unreduced per-point loss of shape (N,))."""
    w1t, b1t, w2t, b2t, w3t = kernel_params
    unreduced = pl.pallas_call(
        _periodic_condition_kernel,
        out_shape=jax.ShapeDtypeStruct((1, N), jnp.float32),
    )(t_row, w1t, b1t, w2t, b2t, w3t)
    # reduce_fn = torch.mean (tiny reduce, fused into the surrounding jit).
    loss = jnp.mean(unreduced)
    return loss, unreduced[0]


if __name__ == "__main__":
    key = jax.random.PRNGKey(0)
    k_t, k1, k2, k3, kb1, kb2, kb3 = jax.random.split(key, 7)

    # non_periodic_sampler points (e.g. time in [0, 1]), emitted lane-dense (1, N)
    t_row = jax.random.uniform(k_t, (1, N), dtype=jnp.float32)

    # deterministic model parameters (synthetic, no checkpoint), torch-style layout
    w1 = jax.random.normal(k1, (D_IN, H), jnp.float32) / jnp.sqrt(D_IN)
    b1 = jax.random.normal(kb1, (1, H), jnp.float32) * 0.1
    w2 = jax.random.normal(k2, (H, H), jnp.float32) / jnp.sqrt(H)
    b2 = jax.random.normal(kb2, (1, H), jnp.float32) * 0.1
    w3 = jax.random.normal(k3, (H, D_OUT), jnp.float32) / jnp.sqrt(H)
    b3 = jax.random.normal(kb3, (1, D_OUT), jnp.float32) * 0.1
    params = (w1, b1, w2, b2, w3, b3)

    # One-time pre-transposition (outside the per-step hot path).
    kernel_params = make_kernel_params(params)

    loss, unreduced = periodic_condition_loss(t_row, kernel_params)
    jax.block_until_ready((loss, unreduced))

    # pure-JAX reference (explicit left/right point batches + b3, as in the module).
    t_b = t_row.T                                            # (N, 1)
    x_left = jnp.concatenate(
        [jnp.full((N, 1), INTERVAL_A, dtype=jnp.float32), t_b], axis=1)
    x_right = jnp.concatenate(
        [jnp.full((N, 1), INTERVAL_B, dtype=jnp.float32), t_b], axis=1)

    def mlp_ref(x):
        h = jnp.tanh(jnp.dot(x, w1, precision=_HIGHEST) + b1)
        h = jnp.tanh(jnp.dot(h, w2, precision=_HIGHEST) + b2)
        return jnp.dot(h, w3, precision=_HIGHEST) + b3

    res_ref = mlp_ref(x_left) - mlp_ref(x_right)
    unred_ref_vals = jnp.sum(res_ref * res_ref, axis=1)      # (N,)
    loss_ref_val = jnp.mean(unred_ref_vals)

    assert np.allclose(np.asarray(loss), np.asarray(loss_ref_val),
                       rtol=1e-5, atol=1e-5)
    assert np.allclose(np.asarray(unreduced), np.asarray(unred_ref_vals),
                       rtol=1e-5, atol=1e-5)
    print("KERNEL_OK")
</pallas_src>

<mosaic_0001>
module attributes {stable_mosaic.version = 11 : i64} {
  func.func @_periodic_condition_kernel(%arg0: memref<1x128xf32, #tpu.memory_space<vmem>>, %arg1: memref<32x2xf32, #tpu.memory_space<vmem>>, %arg2: memref<32x1xf32, #tpu.memory_space<vmem>>, %arg3: memref<32x32xf32, #tpu.memory_space<vmem>>, %arg4: memref<32x1xf32, #tpu.memory_space<vmem>>, %arg5: memref<2x32xf32, #tpu.memory_space<vmem>>, %arg6: memref<1x128xf32, #tpu.memory_space<vmem>>) attributes {dimension_semantics = [], scalar_prefetch = 0 : i64, scratch_operands = 0 : i64, tpu.core_type = #tpu.core_type<tc>} {
    %c0 = arith.constant 0 : index
    %c0_0 = arith.constant 0 : index
    %0 = vector.load %arg1[%c0, %c0_0] : memref<32x2xf32, #tpu.memory_space<vmem>>, vector<32x1xf32>
    %c0_1 = arith.constant 0 : index
    %c1 = arith.constant 1 : index
    %1 = vector.load %arg1[%c0_1, %c1] : memref<32x2xf32, #tpu.memory_space<vmem>>, vector<32x1xf32>
    %c0_2 = arith.constant 0 : index
    %c0_3 = arith.constant 0 : index
    %2 = vector.load %arg0[%c0_2, %c0_3] : memref<1x128xf32, #tpu.memory_space<vmem>>, vector<1x128xf32>
    %3 = vector.broadcast %1 : vector<32x1xf32> to vector<32x128xf32>
    %4 = vector.broadcast %2 : vector<1x128xf32> to vector<32x128xf32>
    %5 = arith.mulf %3, %4 : vector<32x128xf32>
    %c0_4 = arith.constant 0 : index
    %c0_5 = arith.constant 0 : index
    %6 = vector.load %arg2[%c0_4, %c0_5] : memref<32x1xf32, #tpu.memory_space<vmem>>, vector<32x1xf32>
    %7 = vector.broadcast %6 : vector<32x1xf32> to vector<32x128xf32>
    %8 = arith.addf %5, %7 : vector<32x128xf32>
    %cst = arith.constant 6.28318548 : f32
    %9 = vector.broadcast %cst : f32 to vector<32x1xf32>
    %10 = arith.mulf %9, %0 : vector<32x1xf32>
    %11 = vector.broadcast %10 : vector<32x1xf32> to vector<32x128xf32>
    %12 = arith.addf %8, %11 : vector<32x128xf32>
    %13 = tpu.concatenate %8, %12 in 1 : vector<32x128xf32>, vector<32x128xf32> -> vector<32x256xf32>
    %14 = math.tanh %13 : vector<32x256xf32>
    %c0_6 = arith.constant 0 : index
    %c0_7 = arith.constant 0 : index
    %15 = vector.load %arg3[%c0_6, %c0_7] : memref<32x32xf32, #tpu.memory_space<vmem>>, vector<32x32xf32>
    %cst_8 = arith.constant dense<0.000000e+00> : vector<32x256xf32>
    %16 = tpu.matmul %15, %14, %cst_8 {dimension_numbers = #tpu.dot_dimension_numbers<[1], [0], [0], [1], [0, 0, 1, 1], [], []>, precision = #tpu.contract_precision<fp32>} : vector<32x32xf32>, vector<32x256xf32>, vector<32x256xf32> -> vector<32x256xf32>
    %c0_9 = arith.constant 0 : index
    %c0_10 = arith.constant 0 : index
    %17 = vector.load %arg4[%c0_9, %c0_10] : memref<32x1xf32, #tpu.memory_space<vmem>>, vector<32x1xf32>
    %18 = vector.broadcast %17 : vector<32x1xf32> to vector<32x256xf32>
    %19 = arith.addf %16, %18 : vector<32x256xf32>
    %20 = math.tanh %19 : vector<32x256xf32>
    %21 = vector.extract_strided_slice %20 {offsets = [0, 0], sizes = [32, 128], strides = [1, 1]} : vector<32x256xf32> to vector<32x128xf32>
    %22 = vector.extract_strided_slice %20 {offsets = [0, 128], sizes = [32, 128], strides = [1, 1]} : vector<32x256xf32> to vector<32x128xf32>
    %23 = arith.subf %21, %22 : vector<32x128xf32>
    %c0_11 = arith.constant 0 : index
    %c0_12 = arith.constant 0 : index
    %24 = vector.load %arg5[%c0_11, %c0_12] : memref<2x32xf32, #tpu.memory_space<vmem>>, vector<2x32xf32>
    %cst_13 = arith.constant dense<0.000000e+00> : vector<2x128xf32>
    %25 = tpu.matmul %24, %23, %cst_13 {dimension_numbers = #tpu.dot_dimension_numbers<[1], [0], [0], [1], [0, 0, 1, 1], [], []>, precision = #tpu.contract_precision<fp32>} : vector<2x32xf32>, vector<32x128xf32>, vector<2x128xf32> -> vector<2x128xf32>
    %26 = arith.mulf %25, %25 : vector<2x128xf32>
    %cst_14 = arith.constant dense<0.000000e+00> : vector<128xf32>
    %27 = vector.multi_reduction <add>, %26, %cst_14 [0] : vector<2x128xf32> to vector<128xf32>
    %28 = vector.shape_cast %27 : vector<128xf32> to vector<1x128xf32>
    %c0_15 = arith.constant 0 : index
    %c0_16 = arith.constant 0 : index
    %29 = vector.load %arg6[%c0_15, %c0_16] : memref<1x128xf32, #tpu.memory_space<vmem>>, vector<1x128xf32>
    tpu.vector_store %arg6[%c0_15, %c0_16], %28 {strides = array<i32>} : memref<1x128xf32, #tpu.memory_space<vmem>>, vector<1x128xf32>,
    return
  }
}

</mosaic_0001>

<llo_original>
// kernel: periodic_condition_loss.1
$region0: #{periodic_condition_loss.1}
  #allocation0 [shape = 'u32[]', space=smem, size = 0x4, offset = 0x4, fixed_abs, tag = 'smem constant byte address 0x4 - core index']
  #allocation1 [shape = 'u32[144,128]{1,0:T(1,128)}', space=vmem, size = 0x12000, scoped, tag = 'internal scratch']
  %s0 = inlined_call_operand.vmem [shape: f32[1,128], index: 0, kind: input, shape index: {}]
  %s1 = inlined_call_operand.vmem [shape: f32[32,2], index: 1, kind: input, shape index: {}]
  %s2 = inlined_call_operand.vmem [shape: f32[32,1], index: 2, kind: input, shape index: {}]
  %s3 = inlined_call_operand.vmem [shape: f32[32,32], index: 3, kind: input, shape index: {}]
  %s4 = inlined_call_operand.vmem [shape: f32[32,1], index: 4, kind: input, shape index: {}]
  %s5 = inlined_call_operand.vmem [shape: f32[2,32], index: 5, kind: input, shape index: {}]
  %s6 = inlined_call_operand.vmem [shape: f32[1,128], index: 6, kind: output, shape index: {}]
  %s7 = sld [smem:[#allocation0]]
  $region34: #{periodic_condition_loss.1} parent=0
    _
  %s9 = ssub.s32 1, %s7
  %s10 = scalar_select 0, %s9, %s7
  // Predicated region
  $region2: #{periodic_condition_loss.1} parent=0 // pred_check
    _
  $region3: #{periodic_condition_loss.1} parent=0 // pred_check_branch
    %12 = sbr.rel (0) target = $region5
  $region4: #{periodic_condition_loss.1} parent=0 // pred_region
    _
  $region5: #{periodic_condition_loss.1} parent=0 // pred_fallthru
    _
  // Predicated region
  $region6: #{periodic_condition_loss.1} parent=0 // pred_check
    _
  $region7: #{periodic_condition_loss.1} parent=0 // pred_check_branch
    %14 = sbr.rel (0) target = $region9
  $region8: #{periodic_condition_loss.1} parent=0 // pred_region
    _
  $region9: #{periodic_condition_loss.1} parent=0 // pred_fallthru
    _
  // Predicated region
  $region10: #{periodic_condition_loss.1} parent=0 // pred_check
    _
  $region11: #{periodic_condition_loss.1} parent=0 // pred_check_branch
    %16 = sbr.rel (0) target = $region13
  $region12: #{periodic_condition_loss.1} parent=0 // pred_region
    _
  $region13: #{periodic_condition_loss.1} parent=0 // pred_fallthru
    _
  // Predicated region
  $region14: #{periodic_condition_loss.1} parent=0 // pred_check
    _
  $region15: #{periodic_condition_loss.1} parent=0 // pred_check_branch
    %18 = sbr.rel (0) target = $region17
  $region16: #{periodic_condition_loss.1} parent=0 // pred_region
    _
  $region17: #{periodic_condition_loss.1} parent=0 // pred_fallthru
    _
  // Predicated region
  $region18: #{periodic_condition_loss.1} parent=0 // pred_check
    _
  $region19: #{periodic_condition_loss.1} parent=0 // pred_check_branch
    %20 = sbr.rel (0) target = $region21
  $region20: #{periodic_condition_loss.1} parent=0 // pred_region
    _
  $region21: #{periodic_condition_loss.1} parent=0 // pred_fallthru
    _
  // Predicated region
  $region22: #{periodic_condition_loss.1} parent=0 // pred_check
    _
  $region23: #{periodic_condition_loss.1} parent=0 // pred_check_branch
    %22 = sbr.rel (0) target = $region25
  $region24: #{periodic_condition_loss.1} parent=0 // pred_region
    _
  $region25: #{periodic_condition_loss.1} parent=0 // pred_fallthru
    _
  %v23 = vld [vmem:[%s1] sm:$0xff]
  %v24 = vld [vmem:[%s1 + $0x8] sm:$0xff]
  %v25 = vld [vmem:[%s1 + $0x10] sm:$0xff]
  %v26 = vld [vmem:[%s1 + $0x18] sm:$0xff]
  %v27 = vld [vmem:[%s0] sm:$0x1]
  %29 = vset.pattern.permute.xlu0 1
  %30 = vperm.xlu0 %29, %v23
  %v31 = vpop.permute.xlu0 %30
  %34 = vset.pattern.permute.xlu0 1
  %35 = vperm.xlu0 %34, %v24
  %v36 = vpop.permute.xlu0 %35
  %39 = vset.pattern.permute.xlu0 1
  %40 = vperm.xlu0 %39, %v25
  %v41 = vpop.permute.xlu0 %40
  %44 = vset.pattern.permute.xlu0 1
  %45 = vperm.xlu0 %44, %v26
  %v46 = vpop.permute.xlu0 %45
  %v49 = vlaneseq
  %v50 = vshrl.u32 %v49, 7
  %v51 = vsub.s32 0, %v50
  %v52 = vrot.slane %v27, %v51
  %v54 = vmul.f32 %v31, %v52
  %v55 = vmul.f32 %v36, %v52
  %v56 = vmul.f32 %v41, %v52
  %v57 = vmul.f32 %v46, %v52
  %v58 = vld [vmem:[%s2] sm:$0xff]
  %v59 = vld [vmem:[%s2 + $0x8] sm:$0xff]
  %v60 = vld [vmem:[%s2 + $0x10] sm:$0xff]
  %v61 = vld [vmem:[%s2 + $0x18] sm:$0xff]
  %63 = vset.pattern.permute.xlu0 0
  %64 = vperm.xlu0 %63, %v58
  %v65 = vpop.permute.xlu0 %64
  %68 = vset.pattern.permute.xlu0 0
  %69 = vperm.xlu0 %68, %v59
  %v70 = vpop.permute.xlu0 %69
  %73 = vset.pattern.permute.xlu0 0
  %74 = vperm.xlu0 %73, %v60
  %v75 = vpop.permute.xlu0 %74
  %78 = vset.pattern.permute.xlu0 0
  %79 = vperm.xlu0 %78, %v61
  %v80 = vpop.permute.xlu0 %79
  %v82 = vadd.f32 %v54, %v65
  %v83 = vadd.f32 %v55, %v70
  %v84 = vadd.f32 %v56, %v75
  %v85 = vadd.f32 %v57, %v80
  %v86 = vmul.f32 %v23, 6.2831855
  %v87 = vmul.f32 %v24, 6.2831855
  %v88 = vmul.f32 %v25, 6.2831855
  %v89 = vmul.f32 %v26, 6.2831855
  %91 = vset.pattern.permute.xlu0 0
  %92 = vperm.xlu0 %91, %v86
  %v93 = vpop.permute.xlu0 %92
  %96 = vset.pattern.permute.xlu0 0
  %97 = vperm.xlu0 %96, %v87
  %v98 = vpop.permute.xlu0 %97
  %101 = vset.pattern.permute.xlu0 0
  %102 = vperm.xlu0 %101, %v88
  %v103 = vpop.permute.xlu0 %102
  %106 = vset.pattern.permute.xlu0 0
  %107 = vperm.xlu0 %106, %v89
  %v108 = vpop.permute.xlu0 %107
  %v110 = vadd.f32 %v82, %v93
  %v111 = vadd.f32 %v83, %v98
  %v112 = vadd.f32 %v84, %v103
  %v113 = vadd.f32 %v85, %v108
  %v114 = vtanh.pop %v82
  %v115 = vtanh.pop %v110
  %v116 = vtanh.pop %v83
  %v117 = vtanh.pop %v111
  %v118 = vtanh.pop %v84
  %v119 = vtanh.pop %v112
  %v120 = vtanh.pop %v85
  %v121 = vtanh.pop %v113
  %v122 = vld [vmem:[%s3] sm:$0xff]
  %v123 = vld [vmem:[%s3 + $0x8] sm:$0xff]
  %v124 = vld [vmem:[%s3 + $0x10] sm:$0xff]
  %v125 = vld [vmem:[%s3 + $0x18] sm:$0xff]
  %v126 = vld [vmem:[%s4] sm:$0xff]
  %v127 = vld [vmem:[%s4 + $0x8] sm:$0xff]
  %v128 = vld [vmem:[%s4 + $0x10] sm:$0xff]
  %v129 = vld [vmem:[%s4 + $0x18] sm:$0xff]
  %131 = vset.pattern.permute.xlu0 0
  %132 = vperm.xlu0 %131, %v126
  %v133 = vpop.permute.xlu0 %132
  %136 = vset.pattern.permute.xlu0 0
  %137 = vperm.xlu0 %136, %v127
  %v138 = vpop.permute.xlu0 %137
  %141 = vset.pattern.permute.xlu0 0
  %142 = vperm.xlu0 %141, %v128
  %v143 = vpop.permute.xlu0 %142
  %146 = vset.pattern.permute.xlu0 0
  %147 = vperm.xlu0 %146, %v129
  %v148 = vpop.permute.xlu0 %147
  %vm150 = vcmask 261120
  %v152 = vsel %vm150, %v122, 0
  %v155 = vsel %vm150, %v123, 0
  %v158 = vsel %vm150, %v124, 0
  %v161 = vsel %vm150, %v125, 0
  %163 = vmatprep.subr.mxu0 0.0
  %164 = vmatpush1.msra.mxu0 0.0
  %165 = vmatprep.subr.mxu0 0.0
  %166 = vmatpush1.msra.mxu0 0.0
  %167 = vmatprep.subr.mxu0 0.0
  %168 = vmatpush1.msra.mxu0 0.0
  %169 = vmatprep.subr.mxu0 0.0
  %170 = vmatpush1.msra.mxu0 0.0
  %171 = vmatprep.subr.mxu0 0.0
  %172 = vmatpush1.msra.mxu0 0.0
  %173 = vmatprep.subr.mxu0 0.0
  %174 = vmatpush1.msra.mxu0 0.0
  %175 = vmatprep.subr.mxu0 0.0
  %176 = vmatpush1.msra.mxu0 0.0
  %177 = vmatprep.subr.mxu0 0.0
  %178 = vmatpush1.msra.mxu0 0.0
  %179 = vmatprep.subr.mxu0 0.0
  %180 = vmatpush1.msra.mxu0 0.0
  %181 = vmatprep.subr.mxu0 0.0
  %182 = vmatpush1.msra.mxu0 0.0
  %183 = vmatprep.subr.mxu0 0.0
  %184 = vmatpush1.msra.mxu0 0.0
  %185 = vmatprep.subr.mxu0 0.0
  %186 = vmatpush1.msra.mxu0 0.0
  %v187 = vand.u32 %v121, 4294901760
  %188 = vmatprep.subr.mxu0 %v187
  %v189 = vand.u32 %v120, 4294901760
  %190 = vmatpush1.msra.mxu0 %v189
  %v191 = vand.u32 %v119, 4294901760
  %192 = vmatprep.subr.mxu0 %v191
  %v193 = vand.u32 %v118, 4294901760
  %194 = vmatpush1.msra.mxu0 %v193
  %v195 = vand.u32 %v117, 4294901760
  %196 = vmatprep.subr.mxu0 %v195
  %v197 = vand.u32 %v116, 4294901760
  %198 = vmatpush1.msra.mxu0 %v197
  %v199 = vand.u32 %v115, 4294901760
  %200 = vmatprep.subr.mxu0 %v199
  %v201 = vand.u32 %v114, 4294901760
  %202 = vmatpush1.msra.mxu0 %v201
  %203 = vmatprep.subr.mxu0 0.0
  %204 = vmatpush2.msra.mxu0 0.0
  %205 = vmatprep.subr.mxu0 0.0
  %206 = vmatpush2.msra.mxu0 0.0
  %207 = vmatprep.subr.mxu0 0.0
  %208 = vmatpush2.msra.mxu0 0.0
  %209 = vmatprep.subr.mxu0 0.0
  %210 = vmatpush2.msra.mxu0 0.0
  %211 = vmatprep.subr.mxu0 0.0
  %212 = vmatpush2.msra.mxu0 0.0
  %213 = vmatprep.subr.mxu0 0.0
  %214 = vmatpush2.msra.mxu0 0.0
  %215 = vmatprep.subr.mxu0 0.0
  %216 = vmatpush2.msra.mxu0 0.0
  %217 = vmatprep.subr.mxu0 0.0
  %218 = vmatpush2.msra.mxu0 0.0
  %219 = vmatprep.subr.mxu0 0.0
  %220 = vmatpush2.msra.mxu0 0.0
  %221 = vmatprep.subr.mxu0 0.0
  %222 = vmatpush2.msra.mxu0 0.0
  %223 = vmatprep.subr.mxu0 0.0
  %224 = vmatpush2.msra.mxu0 0.0
  %225 = vmatprep.subr.mxu0 0.0
  %226 = vmatpush2.msra.mxu0 0.0
  %227 = vmatprep.subr.mxu0 0.0
  %228 = vmatpush2.msra.mxu0 0.0
  %229 = vmatprep.subr.mxu0 0.0
  %230 = vmatpush2.msra.mxu0 0.0
  %231 = vmatprep.subr.mxu0 0.0
  %232 = vmatpush2.msra.mxu0 0.0
  %233 = vmatprep.subr.mxu0 0.0
  %234 = vmatpush2.msra.mxu0 0.0
  %235 = vmatprep.mubr.f32.mxu0 0.0
  %v236 = vand.u32 %v152, 4294901760
  %v237 = vsub.f32 %v152, %v236
  %v238 = vand.u32 %v237, 4294901760
  %v239 = vsub.f32 %v237, %v238
  %v240 = vand.u32 %v239, 4294901760
  %241 = vmatmul.mubr.f32.gmra.mxu0 %v240
  %v242 = vpop.f32.mrf.mxu0
  %v243 = vadd.f32 %v133, %v242
  %v244 = vpop.f32.mrf.mxu0
  %v245 = vadd.f32 %v133, %v244
  %246 = vmatprep.mubr.f32.mxu0 0.0
  %v247 = vand.u32 %v155, 4294901760
  %v248 = vsub.f32 %v155, %v247
  %v249 = vand.u32 %v248, 4294901760
  %v250 = vsub.f32 %v248, %v249
  %v251 = vand.u32 %v250, 4294901760
  %252 = vmatmul.mubr.f32.gmra.mxu0 %v251
  %v253 = vpop.f32.mrf.mxu0
  %v254 = vadd.f32 %v138, %v253
  %v255 = vpop.f32.mrf.mxu0
  %v256 = vadd.f32 %v138, %v255
  %257 = vmatprep.mubr.f32.mxu0 0.0
  %v258 = vand.u32 %v158, 4294901760
  %v259 = vsub.f32 %v158, %v258
  %v260 = vand.u32 %v259, 4294901760
  %v261 = vsub.f32 %v259, %v260
  %v262 = vand.u32 %v261, 4294901760
  %263 = vmatmul.mubr.f32.gmra.mxu0 %v262
  %v264 = vpop.f32.mrf.mxu0
  %v265 = vadd.f32 %v143, %v264
  %v266 = vpop.f32.mrf.mxu0
  %v267 = vadd.f32 %v143, %v266
  %268 = vmatprep.mubr.f32.mxu0 0.0
  %v269 = vand.u32 %v161, 4294901760
  %v270 = vsub.f32 %v161, %v269
  %v271 = vand.u32 %v270, 4294901760
  %v272 = vsub.f32 %v270, %v271
  %v273 = vand.u32 %v272, 4294901760
  %274 = vmatmul.mubr.f32.gmra.mxu0 %v273
  %v275 = vpop.f32.mrf.mxu0
  %v276 = vadd.f32 %v148, %v275
  %v277 = vpop.f32.mrf.mxu0
  %v278 = vadd.f32 %v148, %v277
  %279 = vdwg.mxu0
  %280 = vmatprep.subr.mxu0 0.0
  %281 = vmatpush1.msra.mxu0 0.0
  %282 = vmatprep.subr.mxu0 0.0
  %283 = vmatpush1.msra.mxu0 0.0
  %284 = vmatprep.subr.mxu0 0.0
  %285 = vmatpush1.msra.mxu0 0.0
  %286 = vmatprep.subr.mxu0 0.0
  %287 = vmatpush1.msra.mxu0 0.0
  %288 = vmatprep.subr.mxu0 0.0
  %289 = vmatpush1.msra.mxu0 0.0
  %290 = vmatprep.subr.mxu0 0.0
  %291 = vmatpush1.msra.mxu0 0.0
  %292 = vmatprep.subr.mxu0 0.0
  %293 = vmatpush1.msra.mxu0 0.0
  %294 = vmatprep.subr.mxu0 0.0
  %295 = vmatpush1.msra.mxu0 0.0
  %296 = vmatprep.subr.mxu0 0.0
  %297 = vmatpush1.msra.mxu0 0.0
  %298 = vmatprep.subr.mxu0 0.0
  %299 = vmatpush1.msra.mxu0 0.0
  %300 = vmatprep.subr.mxu0 0.0
  %301 = vmatpush1.msra.mxu0 0.0
  %302 = vmatprep.subr.mxu0 0.0
  %303 = vmatpush1.msra.mxu0 0.0
  %v304 = vand.u32 %v121, 4294901760
  %v305 = vsub.f32 %v121, %v304
  %v306 = vand.u32 %v305, 4294901760
  %v307 = vsub.f32 %v305, %v306
  %v308 = vand.u32 %v307, 4294901760
  %309 = vmatprep.subr.mxu0 %v308
  %v310 = vand.u32 %v120, 4294901760
  %v311 = vsub.f32 %v120, %v310
  %v312 = vand.u32 %v311, 4294901760
  %v313 = vsub.f32 %v311, %v312
  %v314 = vand.u32 %v313, 4294901760
  %315 = vmatpush1.msra.mxu0 %v314
  %v316 = vand.u32 %v119, 4294901760
  %v317 = vsub.f32 %v119, %v316
  %v318 = vand.u32 %v317, 4294901760
  %v319 = vsub.f32 %v317, %v318
  %v320 = vand.u32 %v319, 4294901760
  %321 = vmatprep.subr.mxu0 %v320
  %v322 = vand.u32 %v118, 4294901760
  %v323 = vsub.f32 %v118, %v322
  %v324 = vand.u32 %v323, 4294901760
  %v325 = vsub.f32 %v323, %v324
  %v326 = vand.u32 %v325, 4294901760
  %327 = vmatpush1.msra.mxu0 %v326
  %v328 = vand.u32 %v117, 4294901760
  %v329 = vsub.f32 %v117, %v328
  %v330 = vand.u32 %v329, 4294901760
  %v331 = vsub.f32 %v329, %v330
  %v332 = vand.u32 %v331, 4294901760
  %333 = vmatprep.subr.mxu0 %v332
  %v334 = vand.u32 %v116, 4294901760
  %v335 = vsub.f32 %v116, %v334
  %v336 = vand.u32 %v335, 4294901760
  %v337 = vsub.f32 %v335, %v336
  %v338 = vand.u32 %v337, 4294901760
  %339 = vmatpush1.msra.mxu0 %v338
  %v340 = vand.u32 %v115, 4294901760
  %v341 = vsub.f32 %v115, %v340
  %v342 = vand.u32 %v341, 4294901760
  %v343 = vsub.f32 %v341, %v342
  %v344 = vand.u32 %v343, 4294901760
  %345 = vmatprep.subr.mxu0 %v344
  %v346 = vand.u32 %v114, 4294901760
  %v347 = vsub.f32 %v114, %v346
  %v348 = vand.u32 %v347, 4294901760
  %v349 = vsub.f32 %v347, %v348
  %v350 = vand.u32 %v349, 4294901760
  %351 = vmatpush1.msra.mxu0 %v350
  %352 = vmatprep.subr.mxu0 0.0
  %353 = vmatpush2.msra.mxu0 0.0
  %354 = vmatprep.subr.mxu0 0.0
  %355 = vmatpush2.msra.mxu0 0.0
  %356 = vmatprep.subr.mxu0 0.0
  %357 = vmatpush2.msra.mxu0 0.0
  %358 = vmatprep.subr.mxu0 0.0
  %359 = vmatpush2.msra.mxu0 0.0
  %360 = vmatprep.subr.mxu0 0.0
  %361 = vmatpush2.msra.mxu0 0.0
  %362 = vmatprep.subr.mxu0 0.0
  %363 = vmatpush2.msra.mxu0 0.0
  %364 = vmatprep.subr.mxu0 0.0
  %365 = vmatpush2.msra.mxu0 0.0
  %366 = vmatprep.subr.mxu0 0.0
  %367 = vmatpush2.msra.mxu0 0.0
  %368 = vmatprep.subr.mxu0 0.0
  %369 = vmatpush2.msra.mxu0 0.0
  %370 = vmatprep.subr.mxu0 0.0
  %371 = vmatpush2.msra.mxu0 0.0
  %372 = vmatprep.subr.mxu0 0.0
  %373 = vmatpush2.msra.mxu0 0.0
  %374 = vmatprep.subr.mxu0 0.0
  %375 = vmatpush2.msra.mxu0 0.0
  %376 = vmatprep.subr.mxu0 0.0
  %377 = vmatpush2.msra.mxu0 0.0
  %378 = vmatprep.subr.mxu0 0.0
  %379 = vmatpush2.msra.mxu0 0.0
  %380 = vmatprep.subr.mxu0 0.0
  %381 = vmatpush2.msra.mxu0 0.0
  %382 = vmatprep.subr.mxu0 0.0
  %383 = vmatpush2.msra.mxu0 0.0
  %384 = vmatprep.mubr.f32.mxu0 0.0
  %v385 = vand.u32 %v152, 4294901760
  %386 = vmatmul.mubr.f32.gmra.mxu0 %v385
  %v387 = vpop.f32.mrf.mxu0
  %v388 = vadd.f32 %v243, %v387
  %v389 = vpop.f32.mrf.mxu0
  %v390 = vadd.f32 %v245, %v389
  %391 = vmatprep.mubr.f32.mxu0 0.0
  %v392 = vand.u32 %v155, 4294901760
  %393 = vmatmul.mubr.f32.gmra.mxu0 %v392
  %v394 = vpop.f32.mrf.mxu0
  %v395 = vadd.f32 %v254, %v394
  %v396 = vpop.f32.mrf.mxu0
  %v397 = vadd.f32 %v256, %v396
  %398 = vmatprep.mubr.f32.mxu0 0.0
  %v399 = vand.u32 %v158, 4294901760
  %400 = vmatmul.mubr.f32.gmra.mxu0 %v399
  %v401 = vpop.f32.mrf.mxu0
  %v402 = vadd.f32 %v265, %v401
  %v403 = vpop.f32.mrf.mxu0
  %v404 = vadd.f32 %v267, %v403
  %405 = vmatprep.mubr.f32.mxu0 0.0
  %v406 = vand.u32 %v161, 4294901760
  %407 = vmatmul.mubr.f32.gmra.mxu0 %v406
  %v408 = vpop.f32.mrf.mxu0
  %v409 = vadd.f32 %v276, %v408
  %v410 = vpop.f32.mrf.mxu0
  %v411 = vadd.f32 %v278, %v410
  %412 = vdwg.mxu0
  %413 = vmatprep.subr.mxu0 0.0
  %414 = vmatpush1.msra.mxu0 0.0
  %415 = vmatprep.subr.mxu0 0.0
  %416 = vmatpush1.msra.mxu0 0.0
  %417 = vmatprep.subr.mxu0 0.0
  %418 = vmatpush1.msra.mxu0 0.0
  %419 = vmatprep.subr.mxu0 0.0
  %420 = vmatpush1.msra.mxu0 0.0
  %421 = vmatprep.subr.mxu0 0.0
  %422 = vmatpush1.msra.mxu0 0.0
  %423 = vmatprep.subr.mxu0 0.0
  %424 = vmatpush1.msra.mxu0 0.0
  %425 = vmatprep.subr.mxu0 0.0
  %426 = vmatpush1.msra.mxu0 0.0
  %427 = vmatprep.subr.mxu0 0.0
  %428 = vmatpush1.msra.mxu0 0.0
  %429 = vmatprep.subr.mxu0 0.0
  %430 = vmatpush1.msra.mxu0 0.0
  %431 = vmatprep.subr.mxu0 0.0
  %432 = vmatpush1.msra.mxu0 0.0
  %433 = vmatprep.subr.mxu0 0.0
  %434 = vmatpush1.msra.mxu0 0.0
  %435 = vmatprep.subr.mxu0 0.0
  %436 = vmatpush1.msra.mxu0 0.0
  %v437 = vand.u32 %v121, 4294901760
  %v438 = vsub.f32 %v121, %v437
  %439 = vmatprep.subr.mxu0 %v438
  %v440 = vand.u32 %v120, 4294901760
  %v441 = vsub.f32 %v120, %v440
  %442 = vmatpush1.msra.mxu0 %v441
  %v443 = vand.u32 %v119, 4294901760
  %v444 = vsub.f32 %v119, %v443
  %445 = vmatprep.subr.mxu0 %v444
  %v446 = vand.u32 %v118, 4294901760
  %v447 = vsub.f32 %v118, %v446
  %448 = vmatpush1.msra.mxu0 %v447
  %v449 = vand.u32 %v117, 4294901760
  %v450 = vsub.f32 %v117, %v449
  %451 = vmatprep.subr.mxu0 %v450
  %v452 = vand.u32 %v116, 4294901760
  %v453 = vsub.f32 %v116, %v452
  %454 = vmatpush1.msra.mxu0 %v453
  %v455 = vand.u32 %v115, 4294901760
  %v456 = vsub.f32 %v115, %v455
  %457 = vmatprep.subr.mxu0 %v456
  %v458 = vand.u32 %v114, 4294901760
  %v459 = vsub.f32 %v114, %v458
  %460 = vmatpush1.msra.mxu0 %v459
  %461 = vmatprep.subr.mxu0 0.0
  %462 = vmatpush2.msra.mxu0 0.0
  %463 = vmatprep.subr.mxu0 0.0
  %464 = vmatpush2.msra.mxu0 0.0
  %465 = vmatprep.subr.mxu0 0.0
  %466 = vmatpush2.msra.mxu0 0.0
  %467 = vmatprep.subr.mxu0 0.0
  %468 = vmatpush2.msra.mxu0 0.0
  %469 = vmatprep.subr.mxu0 0.0
  %470 = vmatpush2.msra.mxu0 0.0
  %471 = vmatprep.subr.mxu0 0.0
  %472 = vmatpush2.msra.mxu0 0.0
  %473 = vmatprep.subr.mxu0 0.0
  %474 = vmatpush2.msra.mxu0 0.0
  %475 = vmatprep.subr.mxu0 0.0
  %476 = vmatpush2.msra.mxu0 0.0
  %477 = vmatprep.subr.mxu0 0.0
  %478 = vmatpush2.msra.mxu0 0.0
  %479 = vmatprep.subr.mxu0 0.0
  %480 = vmatpush2.msra.mxu0 0.0
  %481 = vmatprep.subr.mxu0 0.0
  %482 = vmatpush2.msra.mxu0 0.0
  %483 = vmatprep.subr.mxu0 0.0
  %484 = vmatpush2.msra.mxu0 0.0
  %485 = vmatprep.subr.mxu0 0.0
  %486 = vmatpush2.msra.mxu0 0.0
  %487 = vmatprep.subr.mxu0 0.0
  %488 = vmatpush2.msra.mxu0 0.0
  %489 = vmatprep.subr.mxu0 0.0
  %490 = vmatpush2.msra.mxu0 0.0
  %491 = vmatprep.subr.mxu0 0.0
  %492 = vmatpush2.msra.mxu0 0.0
  %493 = vmatprep.mubr.f32.mxu0 0.0
  %v494 = vand.u32 %v152, 4294901760
  %v495 = vsub.f32 %v152, %v494
  %496 = vmatmul.mubr.f32.gmra.mxu0 %v495
  %v497 = vpop.f32.mrf.mxu0
  %v498 = vadd.f32 %v388, %v497
  %v499 = vpop.f32.mrf.mxu0
  %v500 = vadd.f32 %v390, %v499
  %501 = vmatprep.mubr.f32.mxu0 0.0
  %v502 = vand.u32 %v155, 4294901760
  %v503 = vsub.f32 %v155, %v502
  %504 = vmatmul.mubr.f32.gmra.mxu0 %v503
  %v505 = vpop.f32.mrf.mxu0
  %v506 = vadd.f32 %v395, %v505
  %v507 = vpop.f32.mrf.mxu0
  %v508 = vadd.f32 %v397, %v507
  %509 = vmatprep.mubr.f32.mxu0 0.0
  %v510 = vand.u32 %v158, 4294901760
  %v511 = vsub.f32 %v158, %v510
  %512 = vmatmul.mubr.f32.gmra.mxu0 %v511
  %v513 = vpop.f32.mrf.mxu0
  %v514 = vadd.f32 %v402, %v513
  %v515 = vpop.f32.mrf.mxu0
  %v516 = vadd.f32 %v404, %v515
  %517 = vmatprep.mubr.f32.mxu0 0.0
  %v518 = vand.u32 %v161, 4294901760
  %v519 = vsub.f32 %v161, %v518
  %520 = vmatmul.mubr.f32.gmra.mxu0 %v519
  %v521 = vpop.f32.mrf.mxu0
  %v522 = vadd.f32 %v409, %v521
  %v523 = vpop.f32.mrf.mxu0
  %v524 = vadd.f32 %v411, %v523
  %525 = vdwg.mxu0
  %526 = vmatprep.subr.mxu0 0.0
  %527 = vmatpush1.msra.mxu0 0.0
  %528 = vmatprep.subr.mxu0 0.0
  %529 = vmatpush1.msra.mxu0 0.0
  %530 = vmatprep.subr.mxu0 0.0
  %531 = vmatpush1.msra.mxu0 0.0
  %532 = vmatprep.subr.mxu0 0.0
  %533 = vmatpush1.msra.mxu0 0.0
  %534 = vmatprep.subr.mxu0 0.0
  %535 = vmatpush1.msra.mxu0 0.0
  %536 = vmatprep.subr.mxu0 0.0
  %537 = vmatpush1.msra.mxu0 0.0
  %538 = vmatprep.subr.mxu0 0.0
  %539 = vmatpush1.msra.mxu0 0.0
  %540 = vmatprep.subr.mxu0 0.0
  %541 = vmatpush1.msra.mxu0 0.0
  %542 = vmatprep.subr.mxu0 0.0
  %543 = vmatpush1.msra.mxu0 0.0
  %544 = vmatprep.subr.mxu0 0.0
  %545 = vmatpush1.msra.mxu0 0.0
  %546 = vmatprep.subr.mxu0 0.0
  %547 = vmatpush1.msra.mxu0 0.0
  %548 = vmatprep.subr.mxu0 0.0
  %549 = vmatpush1.msra.mxu0 0.0
  %v550 = vand.u32 %v121, 4294901760
  %551 = vmatprep.subr.mxu0 %v550
  %v552 = vand.u32 %v120, 4294901760
  %553 = vmatpush1.msra.mxu0 %v552
  %v554 = vand.u32 %v119, 4294901760
  %555 = vmatprep.subr.mxu0 %v554
  %v556 = vand.u32 %v118, 4294901760
  %557 = vmatpush1.msra.mxu0 %v556
  %v558 = vand.u32 %v117, 4294901760
  %559 = vmatprep.subr.mxu0 %v558
  %v560 = vand.u32 %v116, 4294901760
  %561 = vmatpush1.msra.mxu0 %v560
  %v562 = vand.u32 %v115, 4294901760
  %563 = vmatprep.subr.mxu0 %v562
  %v564 = vand.u32 %v114, 4294901760
  %565 = vmatpush1.msra.mxu0 %v564
  %566 = vmatprep.subr.mxu0 0.0
  %567 = vmatpush2.msra.mxu0 0.0
  %568 = vmatprep.subr.mxu0 0.0
  %569 = vmatpush2.msra.mxu0 0.0
  %570 = vmatprep.subr.mxu0 0.0
  %571 = vmatpush2.msra.mxu0 0.0
  %572 = vmatprep.subr.mxu0 0.0
  %573 = vmatpush2.msra.mxu0 0.0
  %574 = vmatprep.subr.mxu0 0.0
  %575 = vmatpush2.msra.mxu0 0.0
  %576 = vmatprep.subr.mxu0 0.0
  %577 = vmatpush2.msra.mxu0 0.0
  %578 = vmatprep.subr.mxu0 0.0
  %579 = vmatpush2.msra.mxu0 0.0
  %580 = vmatprep.subr.mxu0 0.0
  %581 = vmatpush2.msra.mxu0 0.0
  %582 = vmatprep.subr.mxu0 0.0
  %583 = vmatpush2.msra.mxu0 0.0
  %584 = vmatprep.subr.mxu0 0.0
  %585 = vmatpush2.msra.mxu0 0.0
  %586 = vmatprep.subr.mxu0 0.0
  %587 = vmatpush2.msra.mxu0 0.0
  %588 = vmatprep.subr.mxu0 0.0
  %589 = vmatpush2.msra.mxu0 0.0
  %590 = vmatprep.subr.mxu0 0.0
  %591 = vmatpush2.msra.mxu0 0.0
  %592 = vmatprep.subr.mxu0 0.0
  %593 = vmatpush2.msra.mxu0 0.0
  %594 = vmatprep.subr.mxu0 0.0
  %595 = vmatpush2.msra.mxu0 0.0
  %596 = vmatprep.subr.mxu0 0.0
  %597 = vmatpush2.msra.mxu0 0.0
  %598 = vmatprep.mubr.f32.mxu0 0.0
  %v599 = vand.u32 %v152, 4294901760
  %v600 = vsub.f32 %v152, %v599
  %v601 = vand.u32 %v600, 4294901760
  %602 = vmatmul.mubr.f32.gmra.mxu0 %v601
  %v603 = vpop.f32.mrf.mxu0
  %v604 = vadd.f32 %v498, %v603
  %v605 = vpop.f32.mrf.mxu0
  %v606 = vadd.f32 %v500, %v605
  %607 = vmatprep.mubr.f32.mxu0 0.0
  %v608 = vand.u32 %v155, 4294901760
  %v609 = vsub.f32 %v155, %v608
  %v610 = vand.u32 %v609, 4294901760
  %611 = vmatmul.mubr.f32.gmra.mxu0 %v610
  %v612 = vpop.f32.mrf.mxu0
  %v613 = vadd.f32 %v506, %v612
  %v614 = vpop.f32.mrf.mxu0
  %v615 = vadd.f32 %v508, %v614
  %616 = vmatprep.mubr.f32.mxu0 0.0
  %v617 = vand.u32 %v158, 4294901760
  %v618 = vsub.f32 %v158, %v617
  %v619 = vand.u32 %v618, 4294901760
  %620 = vmatmul.mubr.f32.gmra.mxu0 %v619
  %v621 = vpop.f32.mrf.mxu0
  %v622 = vadd.f32 %v514, %v621
  %v623 = vpop.f32.mrf.mxu0
  %v624 = vadd.f32 %v516, %v623
  %625 = vmatprep.mubr.f32.mxu0 0.0
  %v626 = vand.u32 %v161, 4294901760
  %v627 = vsub.f32 %v161, %v626
  %v628 = vand.u32 %v627, 4294901760
  %629 = vmatmul.mubr.f32.gmra.mxu0 %v628
  %v630 = vpop.f32.mrf.mxu0
  %v631 = vadd.f32 %v522, %v630
  %v632 = vpop.f32.mrf.mxu0
  %v633 = vadd.f32 %v524, %v632
  %634 = vdwg.mxu0
  %635 = vmatprep.subr.mxu0 0.0
  %636 = vmatpush1.msra.mxu0 0.0
  %637 = vmatprep.subr.mxu0 0.0
  %638 = vmatpush1.msra.mxu0 0.0
  %639 = vmatprep.subr.mxu0 0.0
  %640 = vmatpush1.msra.mxu0 0.0
  %641 = vmatprep.subr.mxu0 0.0
  %642 = vmatpush1.msra.mxu0 0.0
  %643 = vmatprep.subr.mxu0 0.0
  %644 = vmatpush1.msra.mxu0 0.0
  %645 = vmatprep.subr.mxu0 0.0
  %646 = vmatpush1.msra.mxu0 0.0
  %647 = vmatprep.subr.mxu0 0.0
  %648 = vmatpush1.msra.mxu0 0.0
  %649 = vmatprep.subr.mxu0 0.0
  %650 = vmatpush1.msra.mxu0 0.0
  %651 = vmatprep.subr.mxu0 0.0
  %652 = vmatpush1.msra.mxu0 0.0
  %653 = vmatprep.subr.mxu0 0.0
  %654 = vmatpush1.msra.mxu0 0.0
  %655 = vmatprep.subr.mxu0 0.0
  %656 = vmatpush1.msra.mxu0 0.0
  %657 = vmatprep.subr.mxu0 0.0
  %658 = vmatpush1.msra.mxu0 0.0
  %v659 = vand.u32 %v121, 4294901760
  %v660 = vsub.f32 %v121, %v659
  %v661 = vand.u32 %v660, 4294901760
  %662 = vmatprep.subr.mxu0 %v661
  %v663 = vand.u32 %v120, 4294901760
  %v664 = vsub.f32 %v120, %v663
  %v665 = vand.u32 %v664, 4294901760
  %666 = vmatpush1.msra.mxu0 %v665
  %v667 = vand.u32 %v119, 4294901760
  %v668 = vsub.f32 %v119, %v667
  %v669 = vand.u32 %v668, 4294901760
  %670 = vmatprep.subr.mxu0 %v669
  %v671 = vand.u32 %v118, 4294901760
  %v672 = vsub.f32 %v118, %v671
  %v673 = vand.u32 %v672, 4294901760
  %674 = vmatpush1.msra.mxu0 %v673
  %v675 = vand.u32 %v117, 4294901760
  %v676 = vsub.f32 %v117, %v675
  %v677 = vand.u32 %v676, 4294901760
  %678 = vmatprep.subr.mxu0 %v677
  %v679 = vand.u32 %v116, 4294901760
  %v680 = vsub.f32 %v116, %v679
  %v681 = vand.u32 %v680, 4294901760
  %682 = vmatpush1.msra.mxu0 %v681
  %v683 = vand.u32 %v115, 4294901760
  %v684 = vsub.f32 %v115, %v683
  %v685 = vand.u32 %v684, 4294901760
  %686 = vmatprep.subr.mxu0 %v685
  %v687 = vand.u32 %v114, 4294901760
  %v688 = vsub.f32 %v114, %v687
  %v689 = vand.u32 %v688, 4294901760
  %690 = vmatpush1.msra.mxu0 %v689
  %691 = vmatprep.subr.mxu0 0.0
  %692 = vmatpush2.msra.mxu0 0.0
  %693 = vmatprep.subr.mxu0 0.0
  %694 = vmatpush2.msra.mxu0 0.0
  %695 = vmatprep.subr.mxu0 0.0
  %696 = vmatpush2.msra.mxu0 0.0
  %697 = vmatprep.subr.mxu0 0.0
  %698 = vmatpush2.msra.mxu0 0.0
  %699 = vmatprep.subr.mxu0 0.0
  %700 = vmatpush2.msra.mxu0 0.0
  %701 = vmatprep.subr.mxu0 0.0
  %702 = vmatpush2.msra.mxu0 0.0
  %703 = vmatprep.subr.mxu0 0.0
  %704 = vmatpush2.msra.mxu0 0.0
  %705 = vmatprep.subr.mxu0 0.0
  %706 = vmatpush2.msra.mxu0 0.0
  %707 = vmatprep.subr.mxu0 0.0
  %708 = vmatpush2.msra.mxu0 0.0
  %709 = vmatprep.subr.mxu0 0.0
  %710 = vmatpush2.msra.mxu0 0.0
  %711 = vmatprep.subr.mxu0 0.0
  %712 = vmatpush2.msra.mxu0 0.0
  %713 = vmatprep.subr.mxu0 0.0
  %714 = vmatpush2.msra.mxu0 0.0
  %715 = vmatprep.subr.mxu0 0.0
  %716 = vmatpush2.msra.mxu0 0.0
  %717 = vmatprep.subr.mxu0 0.0
  %718 = vmatpush2.msra.mxu0 0.0
  %719 = vmatprep.subr.mxu0 0.0
  %720 = vmatpush2.msra.mxu0 0.0
  %721 = vmatprep.subr.mxu0 0.0
  %722 = vmatpush2.msra.mxu0 0.0
  %723 = vmatprep.mubr.f32.mxu0 0.0
  %v724 = vand.u32 %v152, 4294901760
  %725 = vmatmul.mubr.f32.gmra.mxu0 %v724
  %v726 = vpop.f32.mrf.mxu0
  %v727 = vadd.f32 %v604, %v726
  %v728 = vpop.f32.mrf.mxu0
  %v729 = vadd.f32 %v606, %v728
  %730 = vmatprep.mubr.f32.mxu0 0.0
  %v731 = vand.u32 %v155, 4294901760
  %732 = vmatmul.mubr.f32.gmra.mxu0 %v731
  %v733 = vpop.f32.mrf.mxu0
  %v734 = vadd.f32 %v613, %v733
  %v735 = vpop.f32.mrf.mxu0
  %v736 = vadd.f32 %v615, %v735
  %737 = vmatprep.mubr.f32.mxu0 0.0
  %v738 = vand.u32 %v158, 4294901760
  %739 = vmatmul.mubr.f32.gmra.mxu0 %v738
  %v740 = vpop.f32.mrf.mxu0
  %v741 = vadd.f32 %v622, %v740
  %v742 = vpop.f32.mrf.mxu0
  %v743 = vadd.f32 %v624, %v742
  %744 = vmatprep.mubr.f32.mxu0 0.0
  %v745 = vand.u32 %v161, 4294901760
  %746 = vmatmul.mubr.f32.gmra.mxu0 %v745
  %v747 = vpop.f32.mrf.mxu0
  %v748 = vadd.f32 %v631, %v747
  %v749 = vpop.f32.mrf.mxu0
  %v750 = vadd.f32 %v633, %v749
  %751 = vdwg.mxu0
  %752 = vmatprep.subr.mxu0 0.0
  %753 = vmatpush1.msra.mxu0 0.0
  %754 = vmatprep.subr.mxu0 0.0
  %755 = vmatpush1.msra.mxu0 0.0
  %756 = vmatprep.subr.mxu0 0.0
  %757 = vmatpush1.msra.mxu0 0.0
  %758 = vmatprep.subr.mxu0 0.0
  %759 = vmatpush1.msra.mxu0 0.0
  %760 = vmatprep.subr.mxu0 0.0
  %761 = vmatpush1.msra.mxu0 0.0
  %762 = vmatprep.subr.mxu0 0.0
  %763 = vmatpush1.msra.mxu0 0.0
  %764 = vmatprep.subr.mxu0 0.0
  %765 = vmatpush1.msra.mxu0 0.0
  %766 = vmatprep.subr.mxu0 0.0
  %767 = vmatpush1.msra.mxu0 0.0
  %768 = vmatprep.subr.mxu0 0.0
  %769 = vmatpush1.msra.mxu0 0.0
  %770 = vmatprep.subr.mxu0 0.0
  %771 = vmatpush1.msra.mxu0 0.0
  %772 = vmatprep.subr.mxu0 0.0
  %773 = vmatpush1.msra.mxu0 0.0
  %774 = vmatprep.subr.mxu0 0.0
  %775 = vmatpush1.msra.mxu0 0.0
  %v776 = vand.u32 %v121, 4294901760
  %777 = vmatprep.subr.mxu0 %v776
  %v778 = vand.u32 %v120, 4294901760
  %779 = vmatpush1.msra.mxu0 %v778
  %v780 = vand.u32 %v119, 4294901760
  %781 = vmatprep.subr.mxu0 %v780
  %v782 = vand.u32 %v118, 4294901760
  %783 = vmatpush1.msra.mxu0 %v782
  %v784 = vand.u32 %v117, 4294901760
  %785 = vmatprep.subr.mxu0 %v784
  %v786 = vand.u32 %v116, 4294901760
  %787 = vmatpush1.msra.mxu0 %v786
  %v788 = vand.u32 %v115, 4294901760
  %789 = vmatprep.subr.mxu0 %v788
  %v790 = vand.u32 %v114, 4294901760
  %791 = vmatpush1.msra.mxu0 %v790
  %792 = vmatprep.subr.mxu0 0.0
  %793 = vmatpush2.msra.mxu0 0.0
  %794 = vmatprep.subr.mxu0 0.0
  %795 = vmatpush2.msra.mxu0 0.0
  %796 = vmatprep.subr.mxu0 0.0
  %797 = vmatpush2.msra.mxu0 0.0
  %798 = vmatprep.subr.mxu0 0.0
  %799 = vmatpush2.msra.mxu0 0.0
  %800 = vmatprep.subr.mxu0 0.0
  %801 = vmatpush2.msra.mxu0 0.0
  %802 = vmatprep.subr.mxu0 0.0
  %803 = vmatpush2.msra.mxu0 0.0
  %804 = vmatprep.subr.mxu0 0.0
  %805 = vmatpush2.msra.mxu0 0.0
  %806 = vmatprep.subr.mxu0 0.0
  %807 = vmatpush2.msra.mxu0 0.0
  %808 = vmatprep.subr.mxu0 0.0
  %809 = vmatpush2.msra.mxu0 0.0
  %810 = vmatprep.subr.mxu0 0.0
  %811 = vmatpush2.msra.mxu0 0.0
  %812 = vmatprep.subr.mxu0 0.0
  %813 = vmatpush2.msra.mxu0 0.0
  %814 = vmatprep.subr.mxu0 0.0
  %815 = vmatpush2.msra.mxu0 0.0
  %816 = vmatprep.subr.mxu0 0.0
  %817 = vmatpush2.msra.mxu0 0.0
  %818 = vmatprep.subr.mxu0 0.0
  %819 = vmatpush2.msra.mxu0 0.0
  %820 = vmatprep.subr.mxu0 0.0
  %821 = vmatpush2.msra.mxu0 0.0
  %822 = vmatprep.subr.mxu0 0.0
  %823 = vmatpush2.msra.mxu0 0.0
  %824 = vmatprep.mubr.f32.mxu0 0.0
  %v825 = vand.u32 %v152, 4294901760
  %826 = vmatmul.mubr.f32.gmra.mxu0 %v825
  %v827 = vpop.f32.mrf.mxu0
  %v828 = vadd.f32 %v727, %v827
  %v829 = vpop.f32.mrf.mxu0
  %v830 = vadd.f32 %v729, %v829
  %831 = vmatprep.mubr.f32.mxu0 0.0
  %v832 = vand.u32 %v155, 4294901760
  %833 = vmatmul.mubr.f32.gmra.mxu0 %v832
  %v834 = vpop.f32.mrf.mxu0
  %v835 = vadd.f32 %v734, %v834
  %v836 = vpop.f32.mrf.mxu0
  %v837 = vadd.f32 %v736, %v836
  %838 = vmatprep.mubr.f32.mxu0 0.0
  %v839 = vand.u32 %v158, 4294901760
  %840 = vmatmul.mubr.f32.gmra.mxu0 %v839
  %v841 = vpop.f32.mrf.mxu0
  %v842 = vadd.f32 %v741, %v841
  %v843 = vpop.f32.mrf.mxu0
  %v844 = vadd.f32 %v743, %v843
  %845 = vmatprep.mubr.f32.mxu0 0.0
  %v846 = vand.u32 %v161, 4294901760
  %847 = vmatmul.mubr.f32.gmra.mxu0 %v846
  %v848 = vpop.f32.mrf.mxu0
  %v849 = vadd.f32 %v748, %v848
  %v850 = vpop.f32.mrf.mxu0
  %v851 = vadd.f32 %v750, %v850
  %852 = vdwg.mxu0
  %v853 = vtanh.pop %v828
  %v854 = vtanh.pop %v830
  %v855 = vtanh.pop %v835
  %v856 = vtanh.pop %v837
  %v857 = vtanh.pop %v842
  %v858 = vtanh.pop %v844
  %v859 = vtanh.pop %v849
  %v860 = vtanh.pop %v851
  %v861 = vsub.f32 %v853, %v854
  %v862 = vsub.f32 %v855, %v856
  %v863 = vsub.f32 %v857, %v858
  %v864 = vsub.f32 %v859, %v860
  %v865 = vld [vmem:[%s5] sm:$0x3]
  %v867 = vsel %vm150, %v865, 0
  %869 = vmatprep.subr.mxu0 0.0
  %870 = vmatpush1.msra.mxu0 0.0
  %871 = vmatprep.subr.mxu0 0.0
  %872 = vmatpush1.msra.mxu0 0.0
  %873 = vmatprep.subr.mxu0 0.0
  %874 = vmatpush1.msra.mxu0 0.0
  %875 = vmatprep.subr.mxu0 0.0
  %876 = vmatpush1.msra.mxu0 0.0
  %877 = vmatprep.subr.mxu0 0.0
  %878 = vmatpush1.msra.mxu0 0.0
  %879 = vmatprep.subr.mxu0 0.0
  %880 = vmatpush1.msra.mxu0 0.0
  %881 = vmatprep.subr.mxu0 0.0
  %882 = vmatpush1.msra.mxu0 0.0
  %883 = vmatprep.subr.mxu0 0.0
  %884 = vmatpush1.msra.mxu0 0.0
  %885 = vmatprep.subr.mxu0 0.0
  %886 = vmatpush1.msra.mxu0 0.0
  %887 = vmatprep.subr.mxu0 0.0
  %888 = vmatpush1.msra.mxu0 0.0
  %889 = vmatprep.subr.mxu0 0.0
  %890 = vmatpush1.msra.mxu0 0.0
  %891 = vmatprep.subr.mxu0 0.0
  %892 = vmatpush1.msra.mxu0 0.0
  %893 = vmatprep.subr.mxu0 0.0
  %v894 = vand.u32 %v864, 4294901760
  %895 = vmatpush1.msra.mxu0 %v894
  %896 = vmatprep.subr.mxu0 0.0
  %v897 = vand.u32 %v863, 4294901760
  %898 = vmatpush1.msra.mxu0 %v897
  %899 = vmatprep.subr.mxu0 0.0
  %v900 = vand.u32 %v862, 4294901760
  %901 = vmatpush1.msra.mxu0 %v900
  %902 = vmatprep.subr.mxu0 0.0
  %v903 = vand.u32 %v861, 4294901760
  %904 = vmatpush1.msra.mxu0 %v903
  %905 = vmatprep.subr.mxu0 0.0
  %906 = vmatpush2.msra.mxu0 0.0
  %907 = vmatprep.subr.mxu0 0.0
  %908 = vmatpush2.msra.mxu0 0.0
  %909 = vmatprep.subr.mxu0 0.0
  %910 = vmatpush2.msra.mxu0 0.0
  %911 = vmatprep.subr.mxu0 0.0
  %912 = vmatpush2.msra.mxu0 0.0
  %913 = vmatprep.subr.mxu0 0.0
  %914 = vmatpush2.msra.mxu0 0.0
  %915 = vmatprep.subr.mxu0 0.0
  %916 = vmatpush2.msra.mxu0 0.0
  %917 = vmatprep.subr.mxu0 0.0
  %918 = vmatpush2.msra.mxu0 0.0
  %919 = vmatprep.subr.mxu0 0.0
  %920 = vmatpush2.msra.mxu0 0.0
  %921 = vmatprep.subr.mxu0 0.0
  %922 = vmatpush2.msra.mxu0 0.0
  %923 = vmatprep.subr.mxu0 0.0
  %924 = vmatpush2.msra.mxu0 0.0
  %925 = vmatprep.subr.mxu0 0.0
  %926 = vmatpush2.msra.mxu0 0.0
  %927 = vmatprep.subr.mxu0 0.0
  %928 = vmatpush2.msra.mxu0 0.0
  %929 = vmatprep.subr.mxu0 0.0
  %930 = vmatpush2.msra.mxu0 0.0
  %931 = vmatprep.subr.mxu0 0.0
  %932 = vmatpush2.msra.mxu0 0.0
  %933 = vmatprep.subr.mxu0 0.0
  %934 = vmatpush2.msra.mxu0 0.0
  %935 = vmatprep.subr.mxu0 0.0
  %936 = vmatpush2.msra.mxu0 0.0
  %937 = vmatprep.mubr.f32.mxu0 0.0
  %v938 = vand.u32 %v867, 4294901760
  %v939 = vsub.f32 %v867, %v938
  %v940 = vand.u32 %v939, 4294901760
  %v941 = vsub.f32 %v939, %v940
  %v942 = vand.u32 %v941, 4294901760
  %943 = vmatmul.mubr.f32.gmra.mxu0 %v942
  %v944 = vpop.f32.mrf.mxu0
  %v945 = vadd.f32 0.0, %v944
  %v946 = vpop.f32.mrf.mxu0
  %947 = vdwg.mxu0
  %948 = vmatprep.subr.mxu0 0.0
  %949 = vmatpush1.msra.mxu0 0.0
  %950 = vmatprep.subr.mxu0 0.0
  %951 = vmatpush1.msra.mxu0 0.0
  %952 = vmatprep.subr.mxu0 0.0
  %953 = vmatpush1.msra.mxu0 0.0
  %954 = vmatprep.subr.mxu0 0.0
  %955 = vmatpush1.msra.mxu0 0.0
  %956 = vmatprep.subr.mxu0 0.0
  %957 = vmatpush1.msra.mxu0 0.0
  %958 = vmatprep.subr.mxu0 0.0
  %959 = vmatpush1.msra.mxu0 0.0
  %960 = vmatprep.subr.mxu0 0.0
  %961 = vmatpush1.msra.mxu0 0.0
  %962 = vmatprep.subr.mxu0 0.0
  %963 = vmatpush1.msra.mxu0 0.0
  %964 = vmatprep.subr.mxu0 0.0
  %965 = vmatpush1.msra.mxu0 0.0
  %966 = vmatprep.subr.mxu0 0.0
  %967 = vmatpush1.msra.mxu0 0.0
  %968 = vmatprep.subr.mxu0 0.0
  %969 = vmatpush1.msra.mxu0 0.0
  %970 = vmatprep.subr.mxu0 0.0
  %971 = vmatpush1.msra.mxu0 0.0
  %972 = vmatprep.subr.mxu0 0.0
  %v973 = vand.u32 %v864, 4294901760
  %v974 = vsub.f32 %v864, %v973
  %v975 = vand.u32 %v974, 4294901760
  %v976 = vsub.f32 %v974, %v975
  %v977 = vand.u32 %v976, 4294901760
  %978 = vmatpush1.msra.mxu0 %v977
  %979 = vmatprep.subr.mxu0 0.0
  %v980 = vand.u32 %v863, 4294901760
  %v981 = vsub.f32 %v863, %v980
  %v982 = vand.u32 %v981, 4294901760
  %v983 = vsub.f32 %v981, %v982
  %v984 = vand.u32 %v983, 4294901760
  %985 = vmatpush1.msra.mxu0 %v984
  %986 = vmatprep.subr.mxu0 0.0
  %v987 = vand.u32 %v862, 4294901760
  %v988 = vsub.f32 %v862, %v987
  %v989 = vand.u32 %v988, 4294901760
  %v990 = vsub.f32 %v988, %v989
  %v991 = vand.u32 %v990, 4294901760
  %992 = vmatpush1.msra.mxu0 %v991
  %993 = vmatprep.subr.mxu0 0.0
  %v994 = vand.u32 %v861, 4294901760
  %v995 = vsub.f32 %v861, %v994
  %v996 = vand.u32 %v995, 4294901760
  %v997 = vsub.f32 %v995, %v996
  %v998 = vand.u32 %v997, 4294901760
  %999 = vmatpush1.msra.mxu0 %v998
  %1000 = vmatprep.subr.mxu0 0.0
  %1001 = vmatpush2.msra.mxu0 0.0
  %1002 = vmatprep.subr.mxu0 0.0
  %1003 = vmatpush2.msra.mxu0 0.0
  %1004 = vmatprep.subr.mxu0 0.0
  %1005 = vmatpush2.msra.mxu0 0.0
  %1006 = vmatprep.subr.mxu0 0.0
  %1007 = vmatpush2.msra.mxu0 0.0
  %1008 = vmatprep.subr.mxu0 0.0
  %1009 = vmatpush2.msra.mxu0 0.0
  %1010 = vmatprep.subr.mxu0 0.0
  %1011 = vmatpush2.msra.mxu0 0.0
  %1012 = vmatprep.subr.mxu0 0.0
  %1013 = vmatpush2.msra.mxu0 0.0
  %1014 = vmatprep.subr.mxu0 0.0
  %1015 = vmatpush2.msra.mxu0 0.0
  %1016 = vmatprep.subr.mxu0 0.0
  %1017 = vmatpush2.msra.mxu0 0.0
  %1018 = vmatprep.subr.mxu0 0.0
  %1019 = vmatpush2.msra.mxu0 0.0
  %1020 = vmatprep.subr.mxu0 0.0
  %1021 = vmatpush2.msra.mxu0 0.0
  %1022 = vmatprep.subr.mxu0 0.0
  %1023 = vmatpush2.msra.mxu0 0.0
  %1024 = vmatprep.subr.mxu0 0.0
  %1025 = vmatpush2.msra.mxu0 0.0
  %1026 = vmatprep.subr.mxu0 0.0
  %1027 = vmatpush2.msra.mxu0 0.0
  %1028 = vmatprep.subr.mxu0 0.0
  %1029 = vmatpush2.msra.mxu0 0.0
  %1030 = vmatprep.subr.mxu0 0.0
  %1031 = vmatpush2.msra.mxu0 0.0
  %1032 = vmatprep.mubr.f32.mxu0 0.0
  %v1033 = vand.u32 %v867, 4294901760
  %1034 = vmatmul.mubr.f32.gmra.mxu0 %v1033
  %v1035 = vpop.f32.mrf.mxu0
  %v1036 = vadd.f32 %v945, %v1035
  %v1037 = vpop.f32.mrf.mxu0
  %1038 = vdwg.mxu0
  %1039 = vmatprep.subr.mxu0 0.0
  %1040 = vmatpush1.msra.mxu0 0.0
  %1041 = vmatprep.subr.mxu0 0.0
  %1042 = vmatpush1.msra.mxu0 0.0
  %1043 = vmatprep.subr.mxu0 0.0
  %1044 = vmatpush1.msra.mxu0 0.0
  %1045 = vmatprep.subr.mxu0 0.0
  %1046 = vmatpush1.msra.mxu0 0.0
  %1047 = vmatprep.subr.mxu0 0.0
  %1048 = vmatpush1.msra.mxu0 0.0
  %1049 = vmatprep.subr.mxu0 0.0
  %1050 = vmatpush1.msra.mxu0 0.0
  %1051 = vmatprep.subr.mxu0 0.0
  %1052 = vmatpush1.msra.mxu0 0.0
  %1053 = vmatprep.subr.mxu0 0.0
  %1054 = vmatpush1.msra.mxu0 0.0
  %1055 = vmatprep.subr.mxu0 0.0
  %1056 = vmatpush1.msra.mxu0 0.0
  %1057 = vmatprep.subr.mxu0 0.0
  %1058 = vmatpush1.msra.mxu0 0.0
  %1059 = vmatprep.subr.mxu0 0.0
  %1060 = vmatpush1.msra.mxu0 0.0
  %1061 = vmatprep.subr.mxu0 0.0
  %1062 = vmatpush1.msra.mxu0 0.0
  %1063 = vmatprep.subr.mxu0 0.0
  %v1064 = vand.u32 %v864, 4294901760
  %v1065 = vsub.f32 %v864, %v1064
  %1066 = vmatpush1.msra.mxu0 %v1065
  %1067 = vmatprep.subr.mxu0 0.0
  %v1068 = vand.u32 %v863, 4294901760
  %v1069 = vsub.f32 %v863, %v1068
  %1070 = vmatpush1.msra.mxu0 %v1069
  %1071 = vmatprep.subr.mxu0 0.0
  %v1072 = vand.u32 %v862, 4294901760
  %v1073 = vsub.f32 %v862, %v1072
  %1074 = vmatpush1.msra.mxu0 %v1073
  %1075 = vmatprep.subr.mxu0 0.0
  %v1076 = vand.u32 %v861, 4294901760
  %v1077 = vsub.f32 %v861, %v1076
  %1078 = vmatpush1.msra.mxu0 %v1077
  %1079 = vmatprep.subr.mxu0 0.0
  %1080 = vmatpush2.msra.mxu0 0.0
  %1081 = vmatprep.subr.mxu0 0.0
  %1082 = vmatpush2.msra.mxu0 0.0
  %1083 = vmatprep.subr.mxu0 0.0
  %1084 = vmatpush2.msra.mxu0 0.0
  %1085 = vmatprep.subr.mxu0 0.0
  %1086 = vmatpush2.msra.mxu0 0.0
  %1087 = vmatprep.subr.mxu0 0.0
  %1088 = vmatpush2.msra.mxu0 0.0
  %1089 = vmatprep.subr.mxu0 0.0
  %1090 = vmatpush2.msra.mxu0 0.0
  %1091 = vmatprep.subr.mxu0 0.0
  %1092 = vmatpush2.msra.mxu0 0.0
  %1093 = vmatprep.subr.mxu0 0.0
  %1094 = vmatpush2.msra.mxu0 0.0
  %1095 = vmatprep.subr.mxu0 0.0
  %1096 = vmatpush2.msra.mxu0 0.0
  %1097 = vmatprep.subr.mxu0 0.0
  %1098 = vmatpush2.msra.mxu0 0.0
  %1099 = vmatprep.subr.mxu0 0.0
  %1100 = vmatpush2.msra.mxu0 0.0
  %1101 = vmatprep.subr.mxu0 0.0
  %1102 = vmatpush2.msra.mxu0 0.0
  %1103 = vmatprep.subr.mxu0 0.0
  %1104 = vmatpush2.msra.mxu0 0.0
  %1105 = vmatprep.subr.mxu0 0.0
  %1106 = vmatpush2.msra.mxu0 0.0
  %1107 = vmatprep.subr.mxu0 0.0
  %1108 = vmatpush2.msra.mxu0 0.0
  %1109 = vmatprep.subr.mxu0 0.0
  %1110 = vmatpush2.msra.mxu0 0.0
  %1111 = vmatprep.mubr.f32.mxu0 0.0
  %v1112 = vand.u32 %v867, 4294901760
  %v1113 = vsub.f32 %v867, %v1112
  %1114 = vmatmul.mubr.f32.gmra.mxu0 %v1113
  %v1115 = vpop.f32.mrf.mxu0
  %v1116 = vadd.f32 %v1036, %v1115
  %v1117 = vpop.f32.mrf.mxu0
  %1118 = vdwg.mxu0
  %1119 = vmatprep.subr.mxu0 0.0
  %1120 = vmatpush1.msra.mxu0 0.0
  %1121 = vmatprep.subr.mxu0 0.0
  %1122 = vmatpush1.msra.mxu0 0.0
  %1123 = vmatprep.subr.mxu0 0.0
  %1124 = vmatpush1.msra.mxu0 0.0
  %1125 = vmatprep.subr.mxu0 0.0
  %1126 = vmatpush1.msra.mxu0 0.0
  %1127 = vmatprep.subr.mxu0 0.0
  %1128 = vmatpush1.msra.mxu0 0.0
  %1129 = vmatprep.subr.mxu0 0.0
  %1130 = vmatpush1.msra.mxu0 0.0
  %1131 = vmatprep.subr.mxu0 0.0
  %1132 = vmatpush1.msra.mxu0 0.0
  %1133 = vmatprep.subr.mxu0 0.0
  %1134 = vmatpush1.msra.mxu0 0.0
  %1135 = vmatprep.subr.mxu0 0.0
  %1136 = vmatpush1.msra.mxu0 0.0
  %1137 = vmatprep.subr.mxu0 0.0
  %1138 = vmatpush1.msra.mxu0 0.0
  %1139 = vmatprep.subr.mxu0 0.0
  %1140 = vmatpush1.msra.mxu0 0.0
  %1141 = vmatprep.subr.mxu0 0.0
  %1142 = vmatpush1.msra.mxu0 0.0
  %1143 = vmatprep.subr.mxu0 0.0
  %v1144 = vand.u32 %v864, 4294901760
  %1145 = vmatpush1.msra.mxu0 %v1144
  %1146 = vmatprep.subr.mxu0 0.0
  %v1147 = vand.u32 %v863, 4294901760
  %1148 = vmatpush1.msra.mxu0 %v1147
  %1149 = vmatprep.subr.mxu0 0.0
  %v1150 = vand.u32 %v862, 4294901760
  %1151 = vmatpush1.msra.mxu0 %v1150
  %1152 = vmatprep.subr.mxu0 0.0
  %v1153 = vand.u32 %v861, 4294901760
  %1154 = vmatpush1.msra.mxu0 %v1153
  %1155 = vmatprep.subr.mxu0 0.0
  %1156 = vmatpush2.msra.mxu0 0.0
  %1157 = vmatprep.subr.mxu0 0.0
  %1158 = vmatpush2.msra.mxu0 0.0
  %1159 = vmatprep.subr.mxu0 0.0
  %1160 = vmatpush2.msra.mxu0 0.0
  %1161 = vmatprep.subr.mxu0 0.0
  %1162 = vmatpush2.msra.mxu0 0.0
  %1163 = vmatprep.subr.mxu0 0.0
  %1164 = vmatpush2.msra.mxu0 0.0
  %1165 = vmatprep.subr.mxu0 0.0
  %1166 = vmatpush2.msra.mxu0 0.0
  %1167 = vmatprep.subr.mxu0 0.0
  %1168 = vmatpush2.msra.mxu0 0.0
  %1169 = vmatprep.subr.mxu0 0.0
  %1170 = vmatpush2.msra.mxu0 0.0
  %1171 = vmatprep.subr.mxu0 0.0
  %1172 = vmatpush2.msra.mxu0 0.0
  %1173 = vmatprep.subr.mxu0 0.0
  %1174 = vmatpush2.msra.mxu0 0.0
  %1175 = vmatprep.subr.mxu0 0.0
  %1176 = vmatpush2.msra.mxu0 0.0
  %1177 = vmatprep.subr.mxu0 0.0
  %1178 = vmatpush2.msra.mxu0 0.0
  %1179 = vmatprep.subr.mxu0 0.0
  %1180 = vmatpush2.msra.mxu0 0.0
  %1181 = vmatprep.subr.mxu0 0.0
  %1182 = vmatpush2.msra.mxu0 0.0
  %1183 = vmatprep.subr.mxu0 0.0
  %1184 = vmatpush2.msra.mxu0 0.0
  %1185 = vmatprep.subr.mxu0 0.0
  %1186 = vmatpush2.msra.mxu0 0.0
  %1187 = vmatprep.mubr.f32.mxu0 0.0
  %v1188 = vand.u32 %v867, 4294901760
  %v1189 = vsub.f32 %v867, %v1188
  %v1190 = vand.u32 %v1189, 4294901760
  %1191 = vmatmul.mubr.f32.gmra.mxu0 %v1190
  %v1192 = vpop.f32.mrf.mxu0
  %v1193 = vadd.f32 %v1116, %v1192
  %v1194 = vpop.f32.mrf.mxu0
  %1195 = vdwg.mxu0
  %1196 = vmatprep.subr.mxu0 0.0
  %1197 = vmatpush1.msra.mxu0 0.0
  %1198 = vmatprep.subr.mxu0 0.0
  %1199 = vmatpush1.msra.mxu0 0.0
  %1200 = vmatprep.subr.mxu0 0.0
  %1201 = vmatpush1.msra.mxu0 0.0
  %1202 = vmatprep.subr.mxu0 0.0
  %1203 = vmatpush1.msra.mxu0 0.0
  %1204 = vmatprep.subr.mxu0 0.0
  %1205 = vmatpush1.msra.mxu0 0.0
  %1206 = vmatprep.subr.mxu0 0.0
  %1207 = vmatpush1.msra.mxu0 0.0
  %1208 = vmatprep.subr.mxu0 0.0
  %1209 = vmatpush1.msra.mxu0 0.0
  %1210 = vmatprep.subr.mxu0 0.0
  %1211 = vmatpush1.msra.mxu0 0.0
  %1212 = vmatprep.subr.mxu0 0.0
  %1213 = vmatpush1.msra.mxu0 0.0
  %1214 = vmatprep.subr.mxu0 0.0
  %1215 = vmatpush1.msra.mxu0 0.0
  %1216 = vmatprep.subr.mxu0 0.0
  %1217 = vmatpush1.msra.mxu0 0.0
  %1218 = vmatprep.subr.mxu0 0.0
  %1219 = vmatpush1.msra.mxu0 0.0
  %1220 = vmatprep.subr.mxu0 0.0
  %v1221 = vand.u32 %v864, 4294901760
  %v1222 = vsub.f32 %v864, %v1221
  %v1223 = vand.u32 %v1222, 4294901760
  %1224 = vmatpush1.msra.mxu0 %v1223
  %1225 = vmatprep.subr.mxu0 0.0
  %v1226 = vand.u32 %v863, 4294901760
  %v1227 = vsub.f32 %v863, %v1226
  %v1228 = vand.u32 %v1227, 4294901760
  %1229 = vmatpush1.msra.mxu0 %v1228
  %1230 = vmatprep.subr.mxu0 0.0
  %v1231 = vand.u32 %v862, 4294901760
  %v1232 = vsub.f32 %v862, %v1231
  %v1233 = vand.u32 %v1232, 4294901760
  %1234 = vmatpush1.msra.mxu0 %v1233
  %1235 = vmatprep.subr.mxu0 0.0
  %v1236 = vand.u32 %v861, 4294901760
  %v1237 = vsub.f32 %v861, %v1236
  %v1238 = vand.u32 %v1237, 4294901760
  %1239 = vmatpush1.msra.mxu0 %v1238
  %1240 = vmatprep.subr.mxu0 0.0
  %1241 = vmatpush2.msra.mxu0 0.0
  %1242 = vmatprep.subr.mxu0 0.0
  %1243 = vmatpush2.msra.mxu0 0.0
  %1244 = vmatprep.subr.mxu0 0.0
  %1245 = vmatpush2.msra.mxu0 0.0
  %1246 = vmatprep.subr.mxu0 0.0
  %1247 = vmatpush2.msra.mxu0 0.0
  %1248 = vmatprep.subr.mxu0 0.0
  %1249 = vmatpush2.msra.mxu0 0.0
  %1250 = vmatprep.subr.mxu0 0.0
  %1251 = vmatpush2.msra.mxu0 0.0
  %1252 = vmatprep.subr.mxu0 0.0
  %1253 = vmatpush2.msra.mxu0 0.0
  %1254 = vmatprep.subr.mxu0 0.0
  %1255 = vmatpush2.msra.mxu0 0.0
  %1256 = vmatprep.subr.mxu0 0.0
  %1257 = vmatpush2.msra.mxu0 0.0
  %1258 = vmatprep.subr.mxu0 0.0
  %1259 = vmatpush2.msra.mxu0 0.0
  %1260 = vmatprep.subr.mxu0 0.0
  %1261 = vmatpush2.msra.mxu0 0.0
  %1262 = vmatprep.subr.mxu0 0.0
  %1263 = vmatpush2.msra.mxu0 0.0
  %1264 = vmatprep.subr.mxu0 0.0
  %1265 = vmatpush2.msra.mxu0 0.0
  %1266 = vmatprep.subr.mxu0 0.0
  %1267 = vmatpush2.msra.mxu0 0.0
  %1268 = vmatprep.subr.mxu0 0.0
  %1269 = vmatpush2.msra.mxu0 0.0
  %1270 = vmatprep.subr.mxu0 0.0
  %1271 = vmatpush2.msra.mxu0 0.0
  %1272 = vmatprep.mubr.f32.mxu0 0.0
  %v1273 = vand.u32 %v867, 4294901760
  %1274 = vmatmul.mubr.f32.gmra.mxu0 %v1273
  %v1275 = vpop.f32.mrf.mxu0
  %v1276 = vadd.f32 %v1193, %v1275
  %v1277 = vpop.f32.mrf.mxu0
  %1278 = vdwg.mxu0
  %1279 = vmatprep.subr.mxu0 0.0
  %1280 = vmatpush1.msra.mxu0 0.0
  %1281 = vmatprep.subr.mxu0 0.0
  %1282 = vmatpush1.msra.mxu0 0.0
  %1283 = vmatprep.subr.mxu0 0.0
  %1284 = vmatpush1.msra.mxu0 0.0
  %1285 = vmatprep.subr.mxu0 0.0
  %1286 = vmatpush1.msra.mxu0 0.0
  %1287 = vmatprep.subr.mxu0 0.0
  %1288 = vmatpush1.msra.mxu0 0.0
  %1289 = vmatprep.subr.mxu0 0.0
  %1290 = vmatpush1.msra.mxu0 0.0
  %1291 = vmatprep.subr.mxu0 0.0
  %1292 = vmatpush1.msra.mxu0 0.0
  %1293 = vmatprep.subr.mxu0 0.0
  %1294 = vmatpush1.msra.mxu0 0.0
  %1295 = vmatprep.subr.mxu0 0.0
  %1296 = vmatpush1.msra.mxu0 0.0
  %1297 = vmatprep.subr.mxu0 0.0
  %1298 = vmatpush1.msra.mxu0 0.0
  %1299 = vmatprep.subr.mxu0 0.0
  %1300 = vmatpush1.msra.mxu0 0.0
  %1301 = vmatprep.subr.mxu0 0.0
  %1302 = vmatpush1.msra.mxu0 0.0
  %1303 = vmatprep.subr.mxu0 0.0
  %v1304 = vand.u32 %v864, 4294901760
  %1305 = vmatpush1.msra.mxu0 %v1304
  %1306 = vmatprep.subr.mxu0 0.0
  %v1307 = vand.u32 %v863, 4294901760
  %1308 = vmatpush1.msra.mxu0 %v1307
  %1309 = vmatprep.subr.mxu0 0.0
  %v1310 = vand.u32 %v862, 4294901760
  %1311 = vmatpush1.msra.mxu0 %v1310
  %1312 = vmatprep.subr.mxu0 0.0
  %v1313 = vand.u32 %v861, 4294901760
  %1314 = vmatpush1.msra.mxu0 %v1313
  %1315 = vmatprep.subr.mxu0 0.0
  %1316 = vmatpush2.msra.mxu0 0.0
  %1317 = vmatprep.subr.mxu0 0.0
  %1318 = vmatpush2.msra.mxu0 0.0
  %1319 = vmatprep.subr.mxu0 0.0
  %1320 = vmatpush2.msra.mxu0 0.0
  %1321 = vmatprep.subr.mxu0 0.0
  %1322 = vmatpush2.msra.mxu0 0.0
  %1323 = vmatprep.subr.mxu0 0.0
  %1324 = vmatpush2.msra.mxu0 0.0
  %1325 = vmatprep.subr.mxu0 0.0
  %1326 = vmatpush2.msra.mxu0 0.0
  %1327 = vmatprep.subr.mxu0 0.0
  %1328 = vmatpush2.msra.mxu0 0.0
  %1329 = vmatprep.subr.mxu0 0.0
  %1330 = vmatpush2.msra.mxu0 0.0
  %1331 = vmatprep.subr.mxu0 0.0
  %1332 = vmatpush2.msra.mxu0 0.0
  %1333 = vmatprep.subr.mxu0 0.0
  %1334 = vmatpush2.msra.mxu0 0.0
  %1335 = vmatprep.subr.mxu0 0.0
  %1336 = vmatpush2.msra.mxu0 0.0
  %1337 = vmatprep.subr.mxu0 0.0
  %1338 = vmatpush2.msra.mxu0 0.0
  %1339 = vmatprep.subr.mxu0 0.0
  %1340 = vmatpush2.msra.mxu0 0.0
  %1341 = vmatprep.subr.mxu0 0.0
  %1342 = vmatpush2.msra.mxu0 0.0
  %1343 = vmatprep.subr.mxu0 0.0
  %1344 = vmatpush2.msra.mxu0 0.0
  %1345 = vmatprep.subr.mxu0 0.0
  %1346 = vmatpush2.msra.mxu0 0.0
  %1347 = vmatprep.mubr.f32.mxu0 0.0
  %v1348 = vand.u32 %v867, 4294901760
  %1349 = vmatmul.mubr.f32.gmra.mxu0 %v1348
  %v1350 = vpop.f32.mrf.mxu0
  %v1351 = vadd.f32 %v1276, %v1350
  %v1352 = vpop.f32.mrf.mxu0
  %1353 = vdwg.mxu0
  %v1354 = vmul.f32 %v1351, %v1351
  %vm1355 = vcmask 1041408
  %v1356 = vsel %vm1355, %v1354, 0.0
  %v1357 = vrot.slane %v1356, 4
  %v1358 = vadd.f32 %v1356, %v1357
  %v1359 = vrot.slane %v1358, 2
  %v1360 = vadd.f32 %v1358, %v1359
  %v1361 = vrot.slane %v1360, 1
  %v1362 = vadd.f32 %v1360, %v1361
  %1363 = vst [vmem:[%s6] sm:$0x1] %v1362
  // Predicated region
  $region26: #{periodic_condition_loss.1} parent=0 // pred_check
    _
  $region27: #{periodic_condition_loss.1} parent=0 // pred_check_branch
    %1365 = sbr.rel (0) target = $region29
  $region28: #{periodic_condition_loss.1} parent=0 // pred_region
    _
  $region29: #{periodic_condition_loss.1} parent=0 // pred_fallthru
    _
  // Predicated region
  $region30: #{periodic_condition_loss.1} parent=0 // pred_check
    _
  $region31: #{periodic_condition_loss.1} parent=0 // pred_check_branch
    %1367 = sbr.rel (0) target = $region33
  $region32: #{periodic_condition_loss.1} parent=0 // pred_region
    _
  $region33: #{periodic_condition_loss.1} parent=0 // pred_fallthru
    _

</llo_original>
